<compile_context>
chip_gen: v5e
topology: v5e:2x2
jax: 0.10.0
libtpu: 0.0.40
codegen_flags: <defaults>
</compile_context>

<pallas_src>
import functools

import jax
import jax.numpy as jnp
from jax.experimental import pallas as pl
from jax.experimental.pallas import tpu as pltpu

FEAT_DIM = 2048          # bnneck is hard-coded to 2048 features in the module
BN_EPS = 1e-5            # nn.BatchNorm1d default
L2_EPS = 1e-12           # F.normalize default


def _pick_hw_chunk(hw, max_chunk=2048):
    """Largest multiple of 128 that divides hw and is <= max_chunk, else hw."""
    if hw % 128 != 0:
        return hw
    best = 128
    c = 256
    while c <= min(hw, max_chunk):
        if hw % c == 0:
            best = c
        c += 128
    return best


# --------------------------------------------------------------------------
# Fused kernel:
#   grid = (batch blocks [parallel], HW chunks [arbitrary, reduction])
#   - accumulate spatial sum of the image chunk into a (Nb, C_in) f32 scratch
#   - on the last HW chunk: divide by HW (GAP), project to 2048 (tiny matmul),
#     apply folded BN (scale * x + bias), L2-normalize, store (Nb, 2048).
# --------------------------------------------------------------------------
def _fused_gap_proj_bn_norm_kernel(img_ref, w_ref, scale_ref, bias_ref,
                                   o_ref, acc_ref, *, inv_hw):
    s = pl.program_id(1)

    @pl.when(s == 0)
    def _():
        acc_ref[...] = jnp.zeros_like(acc_ref)

    # Spatial (lane-axis) partial sum of this HW chunk: (Nb, C_in, hw_chunk) -> (Nb, C_in)
    acc_ref[...] += jnp.sum(img_ref[...], axis=-1)

    @pl.when(s == pl.num_programs(1) - 1)
    def _():
        pooled = acc_ref[...] * inv_hw                                 # GAP        (Nb, C_in)
        proj = jnp.dot(pooled, w_ref[...],
                       preferred_element_type=jnp.float32)             # backbone   (Nb, 2048)
        bn = proj * scale_ref[...] + bias_ref[...]                     # BN (no bias term; folded eval stats)
        nrm = jnp.sqrt(jnp.sum(bn * bn, axis=-1, keepdims=True))       # (Nb, 1)
        o_ref[...] = (bn / jnp.maximum(nrm, L2_EPS)).astype(o_ref.dtype)


def fused_gap_proj_bn_normalize(images, backbone_w, bn_scale, bn_bias):
    """images (N, C_in, H, W) f32 -> L2-normalized bn features (N, 2048) f32."""
    N, C_in, H, W = images.shape
    HW = H * W
    x = images.reshape(N, C_in, HW)          # free reshape, no transpose pass

    Nb = N if N <= 8 else 8                  # sublane-friendly batch block
    hw_chunk = _pick_hw_chunk(HW)            # bounded reduction slab
    n_hw_steps = HW // hw_chunk

    scale2 = bn_scale.reshape(1, FEAT_DIM)
    bias2 = bn_bias.reshape(1, FEAT_DIM)

    kernel = functools.partial(_fused_gap_proj_bn_norm_kernel,
                               inv_hw=1.0 / float(HW))

    return pl.pallas_call(
        kernel,
        out_shape=jax.ShapeDtypeStruct((N, FEAT_DIM), jnp.float32),
        grid_spec=pltpu.PrefetchScalarGridSpec(
            num_scalar_prefetch=0,
            grid=(pl.cdiv(N, Nb), n_hw_steps),
            in_specs=[
                pl.BlockSpec((Nb, C_in, hw_chunk), lambda n, s: (n, 0, s)),
                pl.BlockSpec((C_in, FEAT_DIM), lambda n, s: (0, 0)),
                pl.BlockSpec((1, FEAT_DIM), lambda n, s: (0, 0)),
                pl.BlockSpec((1, FEAT_DIM), lambda n, s: (0, 0)),
            ],
            out_specs=pl.BlockSpec((Nb, FEAT_DIM), lambda n, s: (n, 0)),
            scratch_shapes=[pltpu.VMEM((Nb, C_in), jnp.float32)],
        ),
        compiler_params=pltpu.CompilerParams(
            dimension_semantics=("parallel", "arbitrary"),
        ),
    )(x, backbone_w, scale2, bias2)


# --------------------------------------------------------------------------
# Baseline forward (eval path): returns (F.normalize(bn_feat), targets, camid)
# --------------------------------------------------------------------------
def baseline_forward(inputs, params):
    images = inputs["images"]          # (N, C_in, H, W), NCHW like PyTorch
    targets = inputs["targets"]
    camid = inputs["camid"]

    # Fold BN eval stats once (2048-wide, one-time):  bn(x) = x*scale + bias
    scale = params["bn_gamma"] * jax.lax.rsqrt(params["bn_running_var"] + BN_EPS)
    bias = -params["bn_running_mean"] * scale

    bn_feat_normalized = fused_gap_proj_bn_normalize(
        images, params["backbone_w"], scale, bias
    )                                                          # (N, 2048)
    return bn_feat_normalized, targets, camid


# --------------------------------------------------------------------------
# Pure-JAX reference (original op ordering: conv -> GAP -> BN -> normalize)
# --------------------------------------------------------------------------
def baseline_forward_ref(inputs, params):
    images = inputs["images"]
    N, C_in, H, W = images.shape
    x = jnp.transpose(images, (0, 2, 3, 1)).reshape(N * H * W, C_in)
    feats = (x @ params["backbone_w"]).reshape(N, H * W, FEAT_DIM)
    gap = feats.mean(axis=1)
    bn = (gap - params["bn_running_mean"]) * jax.lax.rsqrt(
        params["bn_running_var"] + BN_EPS
    ) * params["bn_gamma"]
    nrm = jnp.sqrt(jnp.sum(bn * bn, axis=-1, keepdims=True))
    return bn / jnp.maximum(nrm, L2_EPS)


if __name__ == "__main__":
    key = jax.random.PRNGKey(0)
    k_img, k_w, k_g, k_m, k_v, k_t, k_c = jax.random.split(key, 7)

    N, C_in, H, W = 2, 4, 16, 16
    images = jax.random.normal(k_img, (N, C_in, H, W), dtype=jnp.float32)
    targets = jax.random.randint(k_t, (N,), 0, 10, dtype=jnp.int32)
    camid = jax.random.randint(k_c, (N,), 0, 6, dtype=jnp.int32)

    params = {
        # synthetic backbone: 1x1 conv C_in -> 2048 (kaiming-ish scale)
        "backbone_w": jax.random.normal(k_w, (C_in, FEAT_DIM), jnp.float32)
        * (2.0 / C_in) ** 0.5,
        # bnneck (weights_init_kaiming: gamma ~ N(1, 0.01); bias disabled)
        "bn_gamma": 1.0 + 0.01 * jax.random.normal(k_g, (FEAT_DIM,), jnp.float32),
        "bn_running_mean": 0.1 * jax.random.normal(k_m, (FEAT_DIM,), jnp.float32),
        "bn_running_var": 0.9
        + 0.1 * jax.random.uniform(k_v, (FEAT_DIM,), jnp.float32),
    }

    inputs = {"images": images, "targets": targets, "camid": camid}

    out_feat, out_targets, out_camid = baseline_forward(inputs, params)
    out_feat = jax.block_until_ready(out_feat)

    ref = baseline_forward_ref(inputs, params)
    assert out_feat.shape == (N, FEAT_DIM)
    assert jnp.allclose(out_feat, ref, atol=1e-4, rtol=1e-4)
    # normalized features should have unit L2 norm
    assert jnp.allclose(jnp.linalg.norm(out_feat, axis=-1), 1.0, atol=1e-4)

    print("KERNEL_OK")
</pallas_src>

<mosaic_0001>
module attributes {stable_mosaic.version = 11 : i64} {
  func.func @_fused_gap_proj_bn_norm_kernel(%arg0: i32, %arg1: i32, %arg2: memref<2x4x256xf32, #tpu.memory_space<vmem>>, %arg3: memref<4x2048xf32, #tpu.memory_space<vmem>>, %arg4: memref<1x2048xf32, #tpu.memory_space<vmem>>, %arg5: memref<1x2048xf32, #tpu.memory_space<vmem>>, %arg6: memref<2x2048xf32, #tpu.memory_space<vmem>>, %arg7: memref<2x4xf32, #tpu.memory_space<vmem>>) attributes {dimension_semantics = [#tpu.dimension_semantics<parallel>, #tpu.dimension_semantics<arbitrary>], iteration_bounds = array<i64: 1, 1>, scalar_prefetch = 0 : i64, scratch_operands = 1 : i64, tpu.core_type = #tpu.core_type<tc>, window_params = [{transform_indices = @transform_0, window_bounds = array<i64: 2, 4, 256>}, {pipeline_mode = #tpu.pipeline_mode<synchronous>, transform_indices = @transform_1, window_bounds = array<i64: 4, 2048>}, {pipeline_mode = #tpu.pipeline_mode<synchronous>, transform_indices = @transform_2, window_bounds = array<i64: 1, 2048>}, {pipeline_mode = #tpu.pipeline_mode<synchronous>, transform_indices = @transform_3, window_bounds = array<i64: 1, 2048>}, {transform_indices = @transform_4, window_bounds = array<i64: 2, 2048>}]} {
    %c0_i32 = arith.constant 0 : i32
    %0 = arith.cmpi eq, %arg1, %c0_i32 : i32
    %1 = arith.extui %0 : i1 to i32
    %c0_i32_0 = arith.constant 0 : i32
    %2 = arith.cmpi ne, %1, %c0_i32_0 : i32
    scf.if %2 {
      %cst_9 = arith.constant 0.000000e+00 : f32
      %11 = vector.broadcast %cst_9 : f32 to vector<2x4xf32>
      %c0_10 = arith.constant 0 : index
      %c0_11 = arith.constant 0 : index
      %12 = vector.load %arg7[%c0_10, %c0_11] : memref<2x4xf32, #tpu.memory_space<vmem>>, vector<2x4xf32>
      tpu.vector_store %arg7[%c0_10, %c0_11], %11 {strides = array<i32>} : memref<2x4xf32, #tpu.memory_space<vmem>>, vector<2x4xf32>,
    } else {
    }
    %c0 = arith.constant 0 : index
    %c0_1 = arith.constant 0 : index
    %3 = vector.load %arg7[%c0, %c0_1] : memref<2x4xf32, #tpu.memory_space<vmem>>, vector<2x4xf32>
    %c0_2 = arith.constant 0 : index
    %c0_3 = arith.constant 0 : index
    %c0_4 = arith.constant 0 : index
    %4 = vector.load %arg2[%c0_2, %c0_3, %c0_4] : memref<2x4x256xf32, #tpu.memory_space<vmem>>, vector<2x4x256xf32>
    %cst = arith.constant dense<0.000000e+00> : vector<2x4xf32>
    %5 = vector.multi_reduction <add>, %4, %cst [2] : vector<2x4x256xf32> to vector<2x4xf32>
    %6 = arith.addf %3, %5 : vector<2x4xf32>
    %c0_5 = arith.constant 0 : index
    %c0_6 = arith.constant 0 : index
    %7 = vector.load %arg7[%c0_5, %c0_6] : memref<2x4xf32, #tpu.memory_space<vmem>>, vector<2x4xf32>
    tpu.vector_store %arg7[%c0_5, %c0_6], %6 {strides = array<i32>} : memref<2x4xf32, #tpu.memory_space<vmem>>, vector<2x4xf32>,
    %c0_i32_7 = arith.constant 0 : i32
    %8 = arith.cmpi eq, %arg1, %c0_i32_7 : i32
    %9 = arith.extui %8 : i1 to i32
    %c0_i32_8 = arith.constant 0 : i32
    %10 = arith.cmpi ne, %9, %c0_i32_8 : i32
    scf.if %10 {
      %c0_9 = arith.constant 0 : index
      %c0_10 = arith.constant 0 : index
      %11 = vector.load %arg7[%c0_9, %c0_10] : memref<2x4xf32, #tpu.memory_space<vmem>>, vector<2x4xf32>
      %cst_11 = arith.constant 3.906250e-03 : f32
      %12 = vector.broadcast %cst_11 : f32 to vector<2x4xf32>
      %13 = arith.mulf %11, %12 : vector<2x4xf32>
      %c0_12 = arith.constant 0 : index
      %c0_13 = arith.constant 0 : index
      %14 = vector.load %arg3[%c0_12, %c0_13] : memref<4x2048xf32, #tpu.memory_space<vmem>>, vector<4x2048xf32>
      %cst_14 = arith.constant dense<0.000000e+00> : vector<2x2048xf32>
      %15 = tpu.matmul %13, %14, %cst_14 {dimension_numbers = #tpu.dot_dimension_numbers<[1], [0], [0], [1], [0, 0, 1, 1], [], []>} : vector<2x4xf32>, vector<4x2048xf32>, vector<2x2048xf32> -> vector<2x2048xf32>
      %c0_15 = arith.constant 0 : index
      %c0_16 = arith.constant 0 : index
      %16 = vector.load %arg4[%c0_15, %c0_16] : memref<1x2048xf32, #tpu.memory_space<vmem>>, vector<1x2048xf32>
      %17 = vector.broadcast %16 : vector<1x2048xf32> to vector<2x2048xf32>
      %18 = arith.mulf %15, %17 : vector<2x2048xf32>
      %c0_17 = arith.constant 0 : index
      %c0_18 = arith.constant 0 : index
      %19 = vector.load %arg5[%c0_17, %c0_18] : memref<1x2048xf32, #tpu.memory_space<vmem>>, vector<1x2048xf32>
      %20 = vector.broadcast %19 : vector<1x2048xf32> to vector<2x2048xf32>
      %21 = arith.addf %18, %20 : vector<2x2048xf32>
      %22 = arith.mulf %21, %21 : vector<2x2048xf32>
      %cst_19 = arith.constant dense<0.000000e+00> : vector<2xf32>
      %23 = vector.multi_reduction <add>, %22, %cst_19 [1] : vector<2x2048xf32> to vector<2xf32>
      %24 = vector.shape_cast %23 : vector<2xf32> to vector<2x1xf32>
      %25 = math.sqrt %24 : vector<2x1xf32>
      %cst_20 = arith.constant 9.99999996E-13 : f32
      %26 = vector.broadcast %cst_20 : f32 to vector<2x1xf32>
      %27 = arith.maximumf %25, %26 : vector<2x1xf32>
      %28 = vector.broadcast %27 : vector<2x1xf32> to vector<2x2048xf32>
      %29 = arith.divf %21, %28 : vector<2x2048xf32>
      %c0_21 = arith.constant 0 : index
      %c0_22 = arith.constant 0 : index
      %30 = vector.load %arg6[%c0_21, %c0_22] : memref<2x2048xf32, #tpu.memory_space<vmem>>, vector<2x2048xf32>
      tpu.vector_store %arg6[%c0_21, %c0_22], %29 {strides = array<i32>} : memref<2x2048xf32, #tpu.memory_space<vmem>>, vector<2x2048xf32>,
    } else {
    }
    return
  }
  func.func @transform_0(%arg0: i32, %arg1: i32) -> (i32, i32, i32) {
    %c0_i32 = arith.constant 0 : i32
    %c0_i32_0 = arith.constant 0 : i32
    return %arg0, %c0_i32, %arg1 : i32, i32, i32
  }
  func.func @transform_1(%arg0: i32, %arg1: i32) -> (i32, i32) {
    %c0_i32 = arith.constant 0 : i32
    %c0_i32_0 = arith.constant 0 : i32
    %c0_i32_1 = arith.constant 0 : i32
    return %c0_i32, %c0_i32_0 : i32, i32
  }
  func.func @transform_2(%arg0: i32, %arg1: i32) -> (i32, i32) {
    %c0_i32 = arith.constant 0 : i32
    %c0_i32_0 = arith.constant 0 : i32
    %c0_i32_1 = arith.constant 0 : i32
    return %c0_i32, %c0_i32_0 : i32, i32
  }
  func.func @transform_3(%arg0: i32, %arg1: i32) -> (i32, i32) {
    %c0_i32 = arith.constant 0 : i32
    %c0_i32_0 = arith.constant 0 : i32
    %c0_i32_1 = arith.constant 0 : i32
    return %c0_i32, %c0_i32_0 : i32, i32
  }
  func.func @transform_4(%arg0: i32, %arg1: i32) -> (i32, i32) {
    %c0_i32 = arith.constant 0 : i32
    %c0_i32_0 = arith.constant 0 : i32
    return %arg0, %c0_i32 : i32, i32
  }
}

</mosaic_0001>

<llo_original>
// kernel: tpu_custom_call.1
$region0: #{tpu_custom_call.1}
  #allocation0 [shape = 'u32[]', space=smem, size = 0x4, offset = 0x4, fixed_abs, tag = 'smem constant byte address 0x4 - core index']
  #allocation1 [shape = 'u32[72,128]{1,0:T(1,128)}', space=vmem, size = 0x9000, scoped, tag = 'internal scratch']
  #allocation2 [shape = 'f32[2,4]{1,0:T(2,128)}', space=vmem, size = 0x400, scoped, tag = 'scratch operand']
  %s0 = inlined_call_operand.hbm [shape: f32[2,4,256], index: 0, kind: input, shape index: {}]
  %s1 = inlined_call_operand.hbm [shape: f32[4,2048], index: 1, kind: input, shape index: {}]
  %s2 = inlined_call_operand.hbm [shape: f32[1,2048], index: 2, kind: input, shape index: {}]
  %s3 = inlined_call_operand.hbm [shape: f32[1,2048], index: 3, kind: input, shape index: {}]
  %s4 = inlined_call_operand.hbm [shape: f32[2,2048], index: 4, kind: output, shape index: {}]
  %s5 = sld [smem:[#allocation0]]
  $region50: #{tpu_custom_call.1} parent=0
    _
  %s7 = ssub.s32 1, %s5
  %s8 = scalar_select 0, %s7, %s5
  $region1: #{tpu_custom_call.1} parent=0
    #allocation3 [shape = 'u8[8192]{0}', space=vmem, size = 0x2000, scoped, tag = 'input window, operand 0, single buffered']
    #allocation4 [shape = 's32[1]{0}', space=sflag, size = 0x4, scoped, tag = 'scoped memory for tpu_custom_call.1']
    #allocation5 [shape = 's32[1]{0}', space=sflag, size = 0x4, scoped, tag = 'scoped memory for tpu_custom_call.1']
    #allocation6 [shape = 'u8[32768]{0}', space=vmem, size = 0x8000, scoped, tag = 'input window, operand 1, single buffered']
    #allocation7 [shape = 's32[1]{0}', space=sflag, size = 0x4, scoped, tag = 'scoped memory for tpu_custom_call.1']
    #allocation8 [shape = 'u8[8192]{0}', space=vmem, size = 0x2000, scoped, tag = 'input window, operand 2, single buffered']
    #allocation9 [shape = 'u8[8192]{0}', space=vmem, size = 0x2000, scoped, tag = 'input window, operand 3, single buffered']
    #allocation10 [shape = 's32[1]{0}', space=sflag, size = 0x4, scoped, tag = 'scoped memory for tpu_custom_call.1']
    #allocation11 [shape = 'u8[16384]{0}', space=vmem, size = 0x4000, scoped, tag = 'output window, operand 0, single buffered']
    %9 = vsyncpa [#allocation4], 0
    %10 = vsyncpa [#allocation7], 0
    %11 = vsyncpa [#allocation10], 0
    %12 = vsyncpa [#allocation5], 0
    // Predicated region
    $region2: #{tpu_custom_call.1} parent=1 // pred_check
      _
    $region3: #{tpu_custom_call.1} parent=1 // pred_check_branch
      %14 = sbr.rel (0) target = $region5
    $region4: #{tpu_custom_call.1} parent=1 // pred_region
      %16 = vsyncadd [#allocation4], 0
      %s17 = sshll.u32 %s0, 4
      %s18 = int_to_ptr.hbm [resolvable:$true] %s17
      %s19 = sshll.u32 [#allocation3], 4
      %s20 = int_to_ptr.vmem [resolvable:$true] %s19
      %25 = dma.hbm_to_vmem [thread:$0]  %s18, 256, %s20, [#allocation4], 128, 128, 8
    $region5: #{tpu_custom_call.1} parent=1 // pred_fallthru
      _
    // Predicated region
    $region6: #{tpu_custom_call.1} parent=1 // pred_check
      _
    $region7: #{tpu_custom_call.1} parent=1 // pred_check_branch
      %27 = sbr.rel (0) target = $region9
    $region8: #{tpu_custom_call.1} parent=1 // pred_region
      %29 = vsyncadd [#allocation7], 0
      %s31 = sshll.u32 %s1, 4
      %s32 = int_to_ptr.hbm [resolvable:$true] %s31
      %s33 = sshll.u32 [#allocation6], 4
      %s34 = int_to_ptr.vmem [resolvable:$true] %s33
      %36 = dma.hbm_to_vmem [thread:$0]  %s32, 1024, %s34, [#allocation7]
    $region9: #{tpu_custom_call.1} parent=1 // pred_fallthru
      _
    // Predicated region
    $region10: #{tpu_custom_call.1} parent=1 // pred_check
      _
    $region11: #{tpu_custom_call.1} parent=1 // pred_check_branch
      %38 = sbr.rel (0) target = $region13
    $region12: #{tpu_custom_call.1} parent=1 // pred_region
      %40 = vsyncadd [#allocation7], 0
      %s42 = sshll.u32 %s2, 4
      %s43 = int_to_ptr.hbm [resolvable:$true] %s42
      %s44 = sshll.u32 [#allocation8], 4
      %s45 = int_to_ptr.vmem [resolvable:$true] %s44
      %47 = dma.hbm_to_vmem [thread:$0]  %s43, 256, %s45, [#allocation7]
    $region13: #{tpu_custom_call.1} parent=1 // pred_fallthru
      _
    // Predicated region
    $region14: #{tpu_custom_call.1} parent=1 // pred_check
      _
    $region15: #{tpu_custom_call.1} parent=1 // pred_check_branch
      %49 = sbr.rel (0) target = $region17
    $region16: #{tpu_custom_call.1} parent=1 // pred_region
      %51 = vsyncadd [#allocation10], 0
      %s53 = sshll.u32 %s3, 4
      %s54 = int_to_ptr.hbm [resolvable:$true] %s53
      %s55 = sshll.u32 [#allocation9], 4
      %s56 = int_to_ptr.vmem [resolvable:$true] %s55
      %58 = dma.hbm_to_vmem [thread:$0]  %s54, 256, %s56, [#allocation10]
    $region17: #{tpu_custom_call.1} parent=1 // pred_fallthru
      _
    // Predicated region
    $region18: #{tpu_custom_call.1} parent=1 // pred_check
      _
    $region19: #{tpu_custom_call.1} parent=1 // pred_check_branch
      %60 = sbr.rel (0) target = $region21
    $region20: #{tpu_custom_call.1} parent=1 // pred_region
      %62 = dma.done [#allocation4], 256
    $region21: #{tpu_custom_call.1} parent=1 // pred_fallthru
      _
    // Predicated region
    $region22: #{tpu_custom_call.1} parent=1 // pred_check
      _
    $region23: #{tpu_custom_call.1} parent=1 // pred_check_branch
      %64 = sbr.rel (0) target = $region25
    $region24: #{tpu_custom_call.1} parent=1 // pred_region
      %66 = dma.done [#allocation7], 1024
    $region25: #{tpu_custom_call.1} parent=1 // pred_fallthru
      _
    // Predicated region
    $region26: #{tpu_custom_call.1} parent=1 // pred_check
      _
    $region27: #{tpu_custom_call.1} parent=1 // pred_check_branch
      %68 = sbr.rel (0) target = $region29
    $region28: #{tpu_custom_call.1} parent=1 // pred_region
      %70 = dma.done [#allocation7], 256
    $region29: #{tpu_custom_call.1} parent=1 // pred_fallthru
      _
    // Predicated region
    $region30: #{tpu_custom_call.1} parent=1 // pred_check
      _
    $region31: #{tpu_custom_call.1} parent=1 // pred_check_branch
      %72 = sbr.rel (0) target = $region33
    $region32: #{tpu_custom_call.1} parent=1 // pred_region
      %74 = dma.done [#allocation10], 256
    $region33: #{tpu_custom_call.1} parent=1 // pred_fallthru
      _
    %p75 = scmp.eq.s32.totalorder 0, 0
    // Predicated region
    $region34: #{tpu_custom_call.1} parent=1 // pred_check
      %p76 = pneg %p75
    $region35: #{tpu_custom_call.1} parent=1 // pred_check_branch
      %78 = sbr.rel (%p76) target = $region37
    $region36: #{tpu_custom_call.1} parent=1 // pred_region
      %vm79 = vcmask 25600
      %80 = vst.msk [vmem:[#allocation2] sm:$0x3] %vm79, 0.0
    $region37: #{tpu_custom_call.1} parent=1 // pred_fallthru
      _
    %v81 = vld [vmem:[#allocation2] sm:$0x3]
    %v82 = vld [vmem:[#allocation3] sm:$0xff]
    %v83 = vld [vmem:[#allocation3 + $0x8] sm:$0xff]
    %86 = vst [vmem:[#allocation1] ss:$2 sm:$0xff] %v82
    %v87 = vld.sshfl [vmem:[#allocation1] sm:$0xff pattern:$0x75316420]
    %v88 = vld.sshfl [vmem:[#allocation1 + $0x8] sm:$0xff pattern:$0x75316420]
    %s89 = scalar_lea.vmem [#allocation1], 16
    %90 = vst [vmem:[%s89] ss:$2 sm:$0xff] %v83
    %v91 = vld.sshfl [vmem:[#allocation1 + $0x10] sm:$0xff pattern:$0x75316420]
    %v92 = vld.sshfl [vmem:[#allocation1 + $0x18] sm:$0xff pattern:$0x75316420]
    %vm97 = vcmask 1043456
    %v98 = vsel %vm97, %v87, 0.0
    %v99 = vsel %vm97, %v88, 0.0
    %v100 = vadd.f32 %v98, %v99
    %101 = vadd.xlane.f32.xlu0 %v100
    %v102 = vpop.xlane.xlu0 %101
    %v103 = vsel %vm97, %v91, 0.0
    %v104 = vsel %vm97, %v92, 0.0
    %v105 = vadd.f32 %v103, %v104
    %106 = vadd.xlane.f32.xlu0 %v105
    %v107 = vpop.xlane.xlu0 %106
    %v110 = vlaneseq
    %v111 = vand.u32 %v110, 127
    %v112 = vperm.slane %v102, %v111
    %v113 = vperm.slane %v107, %v111
    %vm114 = vcmask 1041409
    %v115 = vsel %vm114, %v113, %v112
    %v117 = vadd.f32 %v81, %v115
    %vm118 = vcmask 25600
    %119 = vst.msk [vmem:[#allocation2] sm:$0x3] %vm118, %v117
    // Predicated region
    $region38: #{tpu_custom_call.1} parent=1 // pred_check
      %p120 = pneg %p75
    $region39: #{tpu_custom_call.1} parent=1 // pred_check_branch
      %122 = sbr.rel (%p120) target = $region41
    $region40: #{tpu_custom_call.1} parent=1 // pred_region
      %v123 = vld [vmem:[#allocation2] sm:$0x3]
      %v124 = vmul.f32 %v123, 0.00390625
      %v125 = vld [vmem:[#allocation6] sm:$0xff]
      %v126 = vld [vmem:[#allocation6 + $0x8] sm:$0xff]
      %v127 = vld [vmem:[#allocation6 + $0x10] sm:$0xff]
      %v128 = vld [vmem:[#allocation6 + $0x18] sm:$0xff]
      %v129 = vld [vmem:[#allocation6 + $0x20] sm:$0xff]
      %v130 = vld [vmem:[#allocation6 + $0x28] sm:$0xff]
      %v131 = vld [vmem:[#allocation6 + $0x30] sm:$0xff]
      %v132 = vld [vmem:[#allocation6 + $0x38] sm:$0xff]
      %141 = vst [vmem:[#allocation1] ss:$2 sm:$0xff] %v125
      %s142 = scalar_lea.vmem [#allocation1], 16
      %143 = vst [vmem:[%s142] ss:$2 sm:$0xff] %v126
      %s144 = scalar_lea.vmem [#allocation1], 32
      %145 = vst [vmem:[%s144] ss:$2 sm:$0xff] %v127
      %s146 = scalar_lea.vmem [#allocation1], 48
      %147 = vst [vmem:[%s146] ss:$2 sm:$0xff] %v128
      %v148 = vld.sshfl [vmem:[#allocation1] sm:$0xff pattern:$0x75316420]
      %v149 = vld.sshfl [vmem:[#allocation1 + $0x8] sm:$0xff pattern:$0x75316420]
      %v150 = vld.sshfl [vmem:[#allocation1 + $0x10] sm:$0xff pattern:$0x75316420]
      %v151 = vld.sshfl [vmem:[#allocation1 + $0x18] sm:$0xff pattern:$0x75316420]
      %v152 = vld.sshfl [vmem:[#allocation1 + $0x20] sm:$0xff pattern:$0x75316420]
      %v153 = vld.sshfl [vmem:[#allocation1 + $0x28] sm:$0xff pattern:$0x75316420]
      %v154 = vld.sshfl [vmem:[#allocation1 + $0x30] sm:$0xff pattern:$0x75316420]
      %v155 = vld.sshfl [vmem:[#allocation1 + $0x38] sm:$0xff pattern:$0x75316420]
      %156 = vst [vmem:[#allocation1] ss:$2 sm:$0xff] %v129
      %157 = vst [vmem:[%s142] ss:$2 sm:$0xff] %v130
      %158 = vst [vmem:[%s144] ss:$2 sm:$0xff] %v131
      %159 = vst [vmem:[%s146] ss:$2 sm:$0xff] %v132
      %v160 = vld.sshfl [vmem:[#allocation1] sm:$0xff pattern:$0x75316420]
      %v161 = vld.sshfl [vmem:[#allocation1 + $0x8] sm:$0xff pattern:$0x75316420]
      %v162 = vld.sshfl [vmem:[#allocation1 + $0x10] sm:$0xff pattern:$0x75316420]
      %v163 = vld.sshfl [vmem:[#allocation1 + $0x18] sm:$0xff pattern:$0x75316420]
      %v164 = vld.sshfl [vmem:[#allocation1 + $0x20] sm:$0xff pattern:$0x75316420]
      %v165 = vld.sshfl [vmem:[#allocation1 + $0x28] sm:$0xff pattern:$0x75316420]
      %v166 = vld.sshfl [vmem:[#allocation1 + $0x30] sm:$0xff pattern:$0x75316420]
      %v167 = vld.sshfl [vmem:[#allocation1 + $0x38] sm:$0xff pattern:$0x75316420]
      %vm168 = vcmask 31744
      %v170 = vsel %vm168, %v124, 0
      %v172 = vsel %vm97, %v148, 0
      %v174 = vsel %vm97, %v149, 0
      %v176 = vsel %vm97, %v150, 0
      %v178 = vsel %vm97, %v151, 0
      %v180 = vsel %vm97, %v152, 0
      %v182 = vsel %vm97, %v153, 0
      %v184 = vsel %vm97, %v154, 0
      %v186 = vsel %vm97, %v155, 0
      %v188 = vsel %vm97, %v160, 0
      %v190 = vsel %vm97, %v161, 0
      %v192 = vsel %vm97, %v162, 0
      %v194 = vsel %vm97, %v163, 0
      %v196 = vsel %vm97, %v164, 0
      %v198 = vsel %vm97, %v165, 0
      %v200 = vsel %vm97, %v166, 0
      %v202 = vsel %vm97, %v167, 0
      %204 = vmatpush.msra.mxu0 0.0
      %205 = vmatpush.msra.mxu0 0.0
      %206 = vmatpush.msra.mxu0 0.0
      %207 = vmatpush.msra.mxu0 0.0
      %208 = vmatpush.msra.mxu0 0.0
      %209 = vmatpush.msra.mxu0 0.0
      %210 = vmatpush.msra.mxu0 0.0
      %211 = vmatpush.msra.mxu0 0.0
      %212 = vmatpush.msra.mxu0 0.0
      %213 = vmatpush.msra.mxu0 0.0
      %214 = vmatpush.msra.mxu0 0.0
      %215 = vmatpush.msra.mxu0 0.0
      %216 = vmatpush.msra.mxu0 0.0
      %217 = vmatpush.msra.mxu0 0.0
      %218 = vmatpush.msra.mxu0 0.0
      %219 = vmatpush.msra.mxu0 %v172
      %220 = vmatmul.f32.gmra.mxu0 %v170
      %v221 = vpop.f32.mrf.mxu0
      %v222 = vadd.f32 0.0, %v221
      %223 = vdwg.mxu0
      %224 = vmatpush.msra.mxu0 0.0
      %225 = vmatpush.msra.mxu0 0.0
      %226 = vmatpush.msra.mxu0 0.0
      %227 = vmatpush.msra.mxu0 0.0
      %228 = vmatpush.msra.mxu0 0.0
      %229 = vmatpush.msra.mxu0 0.0
      %230 = vmatpush.msra.mxu0 0.0
      %231 = vmatpush.msra.mxu0 0.0
      %232 = vmatpush.msra.mxu0 0.0
      %233 = vmatpush.msra.mxu0 0.0
      %234 = vmatpush.msra.mxu0 0.0
      %235 = vmatpush.msra.mxu0 0.0
      %236 = vmatpush.msra.mxu0 0.0
      %237 = vmatpush.msra.mxu0 0.0
      %238 = vmatpush.msra.mxu0 0.0
      %239 = vmatpush.msra.mxu0 %v174
      %240 = vmatmul.f32.gmra.mxu0 %v170
      %v241 = vpop.f32.mrf.mxu0
      %v242 = vadd.f32 0.0, %v241
      %243 = vdwg.mxu0
      %244 = vmatpush.msra.mxu0 0.0
      %245 = vmatpush.msra.mxu0 0.0
      %246 = vmatpush.msra.mxu0 0.0
      %247 = vmatpush.msra.mxu0 0.0
      %248 = vmatpush.msra.mxu0 0.0
      %249 = vmatpush.msra.mxu0 0.0
      %250 = vmatpush.msra.mxu0 0.0
      %251 = vmatpush.msra.mxu0 0.0
      %252 = vmatpush.msra.mxu0 0.0
      %253 = vmatpush.msra.mxu0 0.0
      %254 = vmatpush.msra.mxu0 0.0
      %255 = vmatpush.msra.mxu0 0.0
      %256 = vmatpush.msra.mxu0 0.0
      %257 = vmatpush.msra.mxu0 0.0
      %258 = vmatpush.msra.mxu0 0.0
      %259 = vmatpush.msra.mxu0 %v176
      %260 = vmatmul.f32.gmra.mxu0 %v170
      %v261 = vpop.f32.mrf.mxu0
      %v262 = vadd.f32 0.0, %v261
      %263 = vdwg.mxu0
      %264 = vmatpush.msra.mxu0 0.0
      %265 = vmatpush.msra.mxu0 0.0
      %266 = vmatpush.msra.mxu0 0.0
      %267 = vmatpush.msra.mxu0 0.0
      %268 = vmatpush.msra.mxu0 0.0
      %269 = vmatpush.msra.mxu0 0.0
      %270 = vmatpush.msra.mxu0 0.0
      %271 = vmatpush.msra.mxu0 0.0
      %272 = vmatpush.msra.mxu0 0.0
      %273 = vmatpush.msra.mxu0 0.0
      %274 = vmatpush.msra.mxu0 0.0
      %275 = vmatpush.msra.mxu0 0.0
      %276 = vmatpush.msra.mxu0 0.0
      %277 = vmatpush.msra.mxu0 0.0
      %278 = vmatpush.msra.mxu0 0.0
      %279 = vmatpush.msra.mxu0 %v178
      %280 = vmatmul.f32.gmra.mxu0 %v170
      %v281 = vpop.f32.mrf.mxu0
      %v282 = vadd.f32 0.0, %v281
      %283 = vdwg.mxu0
      %284 = vmatpush.msra.mxu0 0.0
      %285 = vmatpush.msra.mxu0 0.0
      %286 = vmatpush.msra.mxu0 0.0
      %287 = vmatpush.msra.mxu0 0.0
      %288 = vmatpush.msra.mxu0 0.0
      %289 = vmatpush.msra.mxu0 0.0
      %290 = vmatpush.msra.mxu0 0.0
      %291 = vmatpush.msra.mxu0 0.0
      %292 = vmatpush.msra.mxu0 0.0
      %293 = vmatpush.msra.mxu0 0.0
      %294 = vmatpush.msra.mxu0 0.0
      %295 = vmatpush.msra.mxu0 0.0
      %296 = vmatpush.msra.mxu0 0.0
      %297 = vmatpush.msra.mxu0 0.0
      %298 = vmatpush.msra.mxu0 0.0
      %299 = vmatpush.msra.mxu0 %v180
      %300 = vmatmul.f32.gmra.mxu0 %v170
      %v301 = vpop.f32.mrf.mxu0
      %v302 = vadd.f32 0.0, %v301
      %303 = vdwg.mxu0
      %304 = vmatpush.msra.mxu0 0.0
      %305 = vmatpush.msra.mxu0 0.0
      %306 = vmatpush.msra.mxu0 0.0
      %307 = vmatpush.msra.mxu0 0.0
      %308 = vmatpush.msra.mxu0 0.0
      %309 = vmatpush.msra.mxu0 0.0
      %310 = vmatpush.msra.mxu0 0.0
      %311 = vmatpush.msra.mxu0 0.0
      %312 = vmatpush.msra.mxu0 0.0
      %313 = vmatpush.msra.mxu0 0.0
      %314 = vmatpush.msra.mxu0 0.0
      %315 = vmatpush.msra.mxu0 0.0
      %316 = vmatpush.msra.mxu0 0.0
      %317 = vmatpush.msra.mxu0 0.0
      %318 = vmatpush.msra.mxu0 0.0
      %319 = vmatpush.msra.mxu0 %v182
      %320 = vmatmul.f32.gmra.mxu0 %v170
      %v321 = vpop.f32.mrf.mxu0
      %v322 = vadd.f32 0.0, %v321
      %323 = vdwg.mxu0
      %324 = vmatpush.msra.mxu0 0.0
      %325 = vmatpush.msra.mxu0 0.0
      %326 = vmatpush.msra.mxu0 0.0
      %327 = vmatpush.msra.mxu0 0.0
      %328 = vmatpush.msra.mxu0 0.0
      %329 = vmatpush.msra.mxu0 0.0
      %330 = vmatpush.msra.mxu0 0.0
      %331 = vmatpush.msra.mxu0 0.0
      %332 = vmatpush.msra.mxu0 0.0
      %333 = vmatpush.msra.mxu0 0.0
      %334 = vmatpush.msra.mxu0 0.0
      %335 = vmatpush.msra.mxu0 0.0
      %336 = vmatpush.msra.mxu0 0.0
      %337 = vmatpush.msra.mxu0 0.0
      %338 = vmatpush.msra.mxu0 0.0
      %339 = vmatpush.msra.mxu0 %v184
      %340 = vmatmul.f32.gmra.mxu0 %v170
      %v341 = vpop.f32.mrf.mxu0
      %v342 = vadd.f32 0.0, %v341
      %343 = vdwg.mxu0
      %344 = vmatpush.msra.mxu0 0.0
      %345 = vmatpush.msra.mxu0 0.0
      %346 = vmatpush.msra.mxu0 0.0
      %347 = vmatpush.msra.mxu0 0.0
      %348 = vmatpush.msra.mxu0 0.0
      %349 = vmatpush.msra.mxu0 0.0
      %350 = vmatpush.msra.mxu0 0.0
      %351 = vmatpush.msra.mxu0 0.0
      %352 = vmatpush.msra.mxu0 0.0
      %353 = vmatpush.msra.mxu0 0.0
      %354 = vmatpush.msra.mxu0 0.0
      %355 = vmatpush.msra.mxu0 0.0
      %356 = vmatpush.msra.mxu0 0.0
      %357 = vmatpush.msra.mxu0 0.0
      %358 = vmatpush.msra.mxu0 0.0
      %359 = vmatpush.msra.mxu0 %v186
      %360 = vmatmul.f32.gmra.mxu0 %v170
      %v361 = vpop.f32.mrf.mxu0
      %v362 = vadd.f32 0.0, %v361
      %363 = vdwg.mxu0
      %364 = vmatpush.msra.mxu0 0.0
      %365 = vmatpush.msra.mxu0 0.0
      %366 = vmatpush.msra.mxu0 0.0
      %367 = vmatpush.msra.mxu0 0.0
      %368 = vmatpush.msra.mxu0 0.0
      %369 = vmatpush.msra.mxu0 0.0
      %370 = vmatpush.msra.mxu0 0.0
      %371 = vmatpush.msra.mxu0 0.0
      %372 = vmatpush.msra.mxu0 0.0
      %373 = vmatpush.msra.mxu0 0.0
      %374 = vmatpush.msra.mxu0 0.0
      %375 = vmatpush.msra.mxu0 0.0
      %376 = vmatpush.msra.mxu0 0.0
      %377 = vmatpush.msra.mxu0 0.0
      %378 = vmatpush.msra.mxu0 0.0
      %379 = vmatpush.msra.mxu0 %v188
      %380 = vmatmul.f32.gmra.mxu0 %v170
      %v381 = vpop.f32.mrf.mxu0
      %v382 = vadd.f32 0.0, %v381
      %383 = vdwg.mxu0
      %384 = vmatpush.msra.mxu0 0.0
      %385 = vmatpush.msra.mxu0 0.0
      %386 = vmatpush.msra.mxu0 0.0
      %387 = vmatpush.msra.mxu0 0.0
      %388 = vmatpush.msra.mxu0 0.0
      %389 = vmatpush.msra.mxu0 0.0
      %390 = vmatpush.msra.mxu0 0.0
      %391 = vmatpush.msra.mxu0 0.0
      %392 = vmatpush.msra.mxu0 0.0
      %393 = vmatpush.msra.mxu0 0.0
      %394 = vmatpush.msra.mxu0 0.0
      %395 = vmatpush.msra.mxu0 0.0
      %396 = vmatpush.msra.mxu0 0.0
      %397 = vmatpush.msra.mxu0 0.0
      %398 = vmatpush.msra.mxu0 0.0
      %399 = vmatpush.msra.mxu0 %v190
      %400 = vmatmul.f32.gmra.mxu0 %v170
      %v401 = vpop.f32.mrf.mxu0
      %v402 = vadd.f32 0.0, %v401
      %403 = vdwg.mxu0
      %404 = vmatpush.msra.mxu0 0.0
      %405 = vmatpush.msra.mxu0 0.0
      %406 = vmatpush.msra.mxu0 0.0
      %407 = vmatpush.msra.mxu0 0.0
      %408 = vmatpush.msra.mxu0 0.0
      %409 = vmatpush.msra.mxu0 0.0
      %410 = vmatpush.msra.mxu0 0.0
      %411 = vmatpush.msra.mxu0 0.0
      %412 = vmatpush.msra.mxu0 0.0
      %413 = vmatpush.msra.mxu0 0.0
      %414 = vmatpush.msra.mxu0 0.0
      %415 = vmatpush.msra.mxu0 0.0
      %416 = vmatpush.msra.mxu0 0.0
      %417 = vmatpush.msra.mxu0 0.0
      %418 = vmatpush.msra.mxu0 0.0
      %419 = vmatpush.msra.mxu0 %v192
      %420 = vmatmul.f32.gmra.mxu0 %v170
      %v421 = vpop.f32.mrf.mxu0
      %v422 = vadd.f32 0.0, %v421
      %423 = vdwg.mxu0
      %424 = vmatpush.msra.mxu0 0.0
      %425 = vmatpush.msra.mxu0 0.0
      %426 = vmatpush.msra.mxu0 0.0
      %427 = vmatpush.msra.mxu0 0.0
      %428 = vmatpush.msra.mxu0 0.0
      %429 = vmatpush.msra.mxu0 0.0
      %430 = vmatpush.msra.mxu0 0.0
      %431 = vmatpush.msra.mxu0 0.0
      %432 = vmatpush.msra.mxu0 0.0
      %433 = vmatpush.msra.mxu0 0.0
      %434 = vmatpush.msra.mxu0 0.0
      %435 = vmatpush.msra.mxu0 0.0
      %436 = vmatpush.msra.mxu0 0.0
      %437 = vmatpush.msra.mxu0 0.0
      %438 = vmatpush.msra.mxu0 0.0
      %439 = vmatpush.msra.mxu0 %v194
      %440 = vmatmul.f32.gmra.mxu0 %v170
      %v441 = vpop.f32.mrf.mxu0
      %v442 = vadd.f32 0.0, %v441
      %443 = vdwg.mxu0
      %444 = vmatpush.msra.mxu0 0.0
      %445 = vmatpush.msra.mxu0 0.0
      %446 = vmatpush.msra.mxu0 0.0
      %447 = vmatpush.msra.mxu0 0.0
      %448 = vmatpush.msra.mxu0 0.0
      %449 = vmatpush.msra.mxu0 0.0
      %450 = vmatpush.msra.mxu0 0.0
      %451 = vmatpush.msra.mxu0 0.0
      %452 = vmatpush.msra.mxu0 0.0
      %453 = vmatpush.msra.mxu0 0.0
      %454 = vmatpush.msra.mxu0 0.0
      %455 = vmatpush.msra.mxu0 0.0
      %456 = vmatpush.msra.mxu0 0.0
      %457 = vmatpush.msra.mxu0 0.0
      %458 = vmatpush.msra.mxu0 0.0
      %459 = vmatpush.msra.mxu0 %v196
      %460 = vmatmul.f32.gmra.mxu0 %v170
      %v461 = vpop.f32.mrf.mxu0
      %v462 = vadd.f32 0.0, %v461
      %463 = vdwg.mxu0
      %464 = vmatpush.msra.mxu0 0.0
      %465 = vmatpush.msra.mxu0 0.0
      %466 = vmatpush.msra.mxu0 0.0
      %467 = vmatpush.msra.mxu0 0.0
      %468 = vmatpush.msra.mxu0 0.0
      %469 = vmatpush.msra.mxu0 0.0
      %470 = vmatpush.msra.mxu0 0.0
      %471 = vmatpush.msra.mxu0 0.0
      %472 = vmatpush.msra.mxu0 0.0
      %473 = vmatpush.msra.mxu0 0.0
      %474 = vmatpush.msra.mxu0 0.0
      %475 = vmatpush.msra.mxu0 0.0
      %476 = vmatpush.msra.mxu0 0.0
      %477 = vmatpush.msra.mxu0 0.0
      %478 = vmatpush.msra.mxu0 0.0
      %479 = vmatpush.msra.mxu0 %v198
      %480 = vmatmul.f32.gmra.mxu0 %v170
      %v481 = vpop.f32.mrf.mxu0
      %v482 = vadd.f32 0.0, %v481
      %483 = vdwg.mxu0
      %484 = vmatpush.msra.mxu0 0.0
      %485 = vmatpush.msra.mxu0 0.0
      %486 = vmatpush.msra.mxu0 0.0
      %487 = vmatpush.msra.mxu0 0.0
      %488 = vmatpush.msra.mxu0 0.0
      %489 = vmatpush.msra.mxu0 0.0
      %490 = vmatpush.msra.mxu0 0.0
      %491 = vmatpush.msra.mxu0 0.0
      %492 = vmatpush.msra.mxu0 0.0
      %493 = vmatpush.msra.mxu0 0.0
      %494 = vmatpush.msra.mxu0 0.0
      %495 = vmatpush.msra.mxu0 0.0
      %496 = vmatpush.msra.mxu0 0.0
      %497 = vmatpush.msra.mxu0 0.0
      %498 = vmatpush.msra.mxu0 0.0
      %499 = vmatpush.msra.mxu0 %v200
      %500 = vmatmul.f32.gmra.mxu0 %v170
      %v501 = vpop.f32.mrf.mxu0
      %v502 = vadd.f32 0.0, %v501
      %503 = vdwg.mxu0
      %504 = vmatpush.msra.mxu0 0.0
      %505 = vmatpush.msra.mxu0 0.0
      %506 = vmatpush.msra.mxu0 0.0
      %507 = vmatpush.msra.mxu0 0.0
      %508 = vmatpush.msra.mxu0 0.0
      %509 = vmatpush.msra.mxu0 0.0
      %510 = vmatpush.msra.mxu0 0.0
      %511 = vmatpush.msra.mxu0 0.0
      %512 = vmatpush.msra.mxu0 0.0
      %513 = vmatpush.msra.mxu0 0.0
      %514 = vmatpush.msra.mxu0 0.0
      %515 = vmatpush.msra.mxu0 0.0
      %516 = vmatpush.msra.mxu0 0.0
      %517 = vmatpush.msra.mxu0 0.0
      %518 = vmatpush.msra.mxu0 0.0
      %519 = vmatpush.msra.mxu0 %v202
      %520 = vmatmul.f32.gmra.mxu0 %v170
      %v521 = vpop.f32.mrf.mxu0
      %v522 = vadd.f32 0.0, %v521
      %523 = vdwg.mxu0
      %v524 = vld [vmem:[#allocation8] sm:$0xff]
      %v525 = vld [vmem:[#allocation8 + $0x8] sm:$0xff]
      %v528 = vperm.slane %v524, 0
      %v529 = vperm.slane %v524, 1
      %v530 = vperm.slane %v524, 2
      %v531 = vperm.slane %v524, 3
      %v532 = vperm.slane %v524, 4
      %v533 = vperm.slane %v524, 5
      %v534 = vperm.slane %v524, 6
      %v535 = vperm.slane %v524, 7
      %v536 = vperm.slane %v525, 0
      %v537 = vperm.slane %v525, 1
      %v538 = vperm.slane %v525, 2
      %v539 = vperm.slane %v525, 3
      %v540 = vperm.slane %v525, 4
      %v541 = vperm.slane %v525, 5
      %v542 = vperm.slane %v525, 6
      %v543 = vperm.slane %v525, 7
      %v560 = vmul.f32 %v222, %v528
      %v561 = vmul.f32 %v242, %v529
      %v562 = vmul.f32 %v262, %v530
      %v563 = vmul.f32 %v282, %v531
      %v564 = vmul.f32 %v302, %v532
      %v565 = vmul.f32 %v322, %v533
      %v566 = vmul.f32 %v342, %v534
      %v567 = vmul.f32 %v362, %v535
      %v568 = vmul.f32 %v382, %v536
      %v569 = vmul.f32 %v402, %v537
      %v570 = vmul.f32 %v422, %v538
      %v571 = vmul.f32 %v442, %v539
      %v572 = vmul.f32 %v462, %v540
      %v573 = vmul.f32 %v482, %v541
      %v574 = vmul.f32 %v502, %v542
      %v575 = vmul.f32 %v522, %v543
      %v576 = vld [vmem:[#allocation9] sm:$0xff]
      %v577 = vld [vmem:[#allocation9 + $0x8] sm:$0xff]
      %v580 = vperm.slane %v576, 0
      %v581 = vperm.slane %v576, 1
      %v582 = vperm.slane %v576, 2
      %v583 = vperm.slane %v576, 3
      %v584 = vperm.slane %v576, 4
      %v585 = vperm.slane %v576, 5
      %v586 = vperm.slane %v576, 6
      %v587 = vperm.slane %v576, 7
      %v588 = vperm.slane %v577, 0
      %v589 = vperm.slane %v577, 1
      %v590 = vperm.slane %v577, 2
      %v591 = vperm.slane %v577, 3
      %v592 = vperm.slane %v577, 4
      %v593 = vperm.slane %v577, 5
      %v594 = vperm.slane %v577, 6
      %v595 = vperm.slane %v577, 7
      %v612 = vadd.f32 %v560, %v580
      %v613 = vadd.f32 %v561, %v581
      %v614 = vadd.f32 %v562, %v582
      %v615 = vadd.f32 %v563, %v583
      %v616 = vadd.f32 %v564, %v584
      %v617 = vadd.f32 %v565, %v585
      %v618 = vadd.f32 %v566, %v586
      %v619 = vadd.f32 %v567, %v587
      %v620 = vadd.f32 %v568, %v588
      %v621 = vadd.f32 %v569, %v589
      %v622 = vadd.f32 %v570, %v590
      %v623 = vadd.f32 %v571, %v591
      %v624 = vadd.f32 %v572, %v592
      %v625 = vadd.f32 %v573, %v593
      %v626 = vadd.f32 %v574, %v594
      %v627 = vadd.f32 %v575, %v595
      %v628 = vmul.f32 %v612, %v612
      %v629 = vmul.f32 %v613, %v613
      %v630 = vmul.f32 %v614, %v614
      %v631 = vmul.f32 %v615, %v615
      %v632 = vmul.f32 %v616, %v616
      %v633 = vmul.f32 %v617, %v617
      %v634 = vmul.f32 %v618, %v618
      %v635 = vmul.f32 %v619, %v619
      %v636 = vmul.f32 %v620, %v620
      %v637 = vmul.f32 %v621, %v621
      %v638 = vmul.f32 %v622, %v622
      %v639 = vmul.f32 %v623, %v623
      %v640 = vmul.f32 %v624, %v624
      %v641 = vmul.f32 %v625, %v625
      %v642 = vmul.f32 %v626, %v626
      %v643 = vmul.f32 %v627, %v627
      %vm644 = vcmask 1041408
      %v645 = vsel %vm644, %v628, 0.0
      %v646 = vsel %vm644, %v629, 0.0
      %v647 = vadd.f32 %v645, %v646
      %v648 = vsel %vm644, %v630, 0.0
      %v649 = vadd.f32 %v647, %v648
      %v650 = vsel %vm644, %v631, 0.0
      %v651 = vadd.f32 %v649, %v650
      %v652 = vsel %vm644, %v632, 0.0
      %v653 = vadd.f32 %v651, %v652
      %v654 = vsel %vm644, %v633, 0.0
      %v655 = vadd.f32 %v653, %v654
      %v656 = vsel %vm644, %v634, 0.0
      %v657 = vadd.f32 %v655, %v656
      %v658 = vsel %vm644, %v635, 0.0
      %v659 = vadd.f32 %v657, %v658
      %v660 = vsel %vm644, %v636, 0.0
      %v661 = vadd.f32 %v659, %v660
      %v662 = vsel %vm644, %v637, 0.0
      %v663 = vadd.f32 %v661, %v662
      %v664 = vsel %vm644, %v638, 0.0
      %v665 = vadd.f32 %v663, %v664
      %v666 = vsel %vm644, %v639, 0.0
      %v667 = vadd.f32 %v665, %v666
      %v668 = vsel %vm644, %v640, 0.0
      %v669 = vadd.f32 %v667, %v668
      %v670 = vsel %vm644, %v641, 0.0
      %v671 = vadd.f32 %v669, %v670
      %v672 = vsel %vm644, %v642, 0.0
      %v673 = vadd.f32 %v671, %v672
      %v674 = vsel %vm644, %v643, 0.0
      %v675 = vadd.f32 %v673, %v674
      %676 = vadd.xlane.f32.xlu0 %v675
      %v677 = vpop.xlane.xlu0 %676
      %v678 = vrsqrt.pop %v677
      %v679 = vmul.f32 %v678, %v677
      %v680 = vmul.f32 %v679, %v678
      %v681 = vmul.f32 0.5, %v680
      %v682 = vsub.f32 1.5, %v681
      %v683 = vmul.f32 %v678, %v682
      %v684 = vmul.f32 %v677, %v683
      %vm685 = vcmp.eq.f32.partialorder %v677, inf
      %v686 = vsel %vm685, %v677, %v684
      %vm687 = vcmp.eq.f32.partialorder %v677, 0.0
      %v688 = vand.u32 %v677, 2147483648
      %v689 = vsel %vm687, %v688, %v686
      %v690 = vmax.f32 %v689, 1e-12
      %v691 = vrcp.pop %v690
      %v692 = vmul.f32 %v690, %v691
      %v693 = vsub.f32 1.0, %v692
      %v694 = vmul.f32 %v691, %v693
      %v695 = vadd.f32 %v691, %v694
      %vm696 = vweird.f32 %v690
      %vm697 = vweird.f32 %v691
      %vm698 = vmor %vm696, %vm697
      %v699 = vsel %vm698, %v691, %v695
      %v700 = vand.u32 2147483647, %v690
      %vm701 = vcmp.eq.f32.partialorder %v700, 8.507059e+37
      %v702 = vand.u32 %v690, 2147483648
      %v703 = vor.u32 1.1754944e-38, %v702
      %v704 = vsel %vm701, %v703, %v699
      %v705 = vmul.f32 %v612, %v704
      %v706 = vmul.f32 %v613, %v704
      %v707 = vmul.f32 %v614, %v704
      %v708 = vmul.f32 %v615, %v704
      %v709 = vmul.f32 %v616, %v704
      %v710 = vmul.f32 %v617, %v704
      %v711 = vmul.f32 %v618, %v704
      %v712 = vmul.f32 %v619, %v704
      %v713 = vmul.f32 %v620, %v704
      %v714 = vmul.f32 %v621, %v704
      %v715 = vmul.f32 %v622, %v704
      %v716 = vmul.f32 %v623, %v704
      %v717 = vmul.f32 %v624, %v704
      %v718 = vmul.f32 %v625, %v704
      %v719 = vmul.f32 %v626, %v704
      %v720 = vmul.f32 %v627, %v704
      %v737 = vrot.slane %v706, 6
      %v738 = vrot.slane %v707, 4
      %v739 = vrot.slane %v708, 2
      %v740 = vrot.slane %v710, 6
      %v741 = vrot.slane %v711, 4
      %v742 = vrot.slane %v712, 2
      %v743 = vrot.slane %v714, 6
      %v744 = vrot.slane %v715, 4
      %v745 = vrot.slane %v716, 2
      %v746 = vrot.slane %v718, 6
      %v747 = vrot.slane %v719, 4
      %v748 = vrot.slane %v720, 2
      %v749 = vsel %vm644, %v705, %v737
      %vm750 = vcmask 1045508
      %v751 = vsel %vm750, %v738, %v739
      %v752 = vsel %vm97, %v749, %v751
      %v753 = vsel %vm644, %v709, %v740
      %v754 = vsel %vm750, %v741, %v742
      %v755 = vsel %vm97, %v753, %v754
      %v756 = vsel %vm644, %v713, %v743
      %v757 = vsel %vm750, %v744, %v745
      %v758 = vsel %vm97, %v756, %v757
      %v759 = vsel %vm644, %v717, %v746
      %v760 = vsel %vm750, %v747, %v748
      %v761 = vsel %vm97, %v759, %v760
      %766 = vst [vmem:[#allocation11] sm:$0xff] %v752
      %767 = vst [vmem:[#allocation11 + $0x8] sm:$0xff] %v755
      %768 = vst [vmem:[#allocation11 + $0x10] sm:$0xff] %v758
      %769 = vst [vmem:[#allocation11 + $0x18] sm:$0xff] %v761
    $region41: #{tpu_custom_call.1} parent=1 // pred_fallthru
      _
    // Predicated region
    $region42: #{tpu_custom_call.1} parent=1 // pred_check
      _
    $region43: #{tpu_custom_call.1} parent=1 // pred_check_branch
      %771 = sbr.rel (0) target = $region45
    $region44: #{tpu_custom_call.1} parent=1 // pred_region
      %773 = vsyncadd [#allocation5], 0
      %s775 = sshll.u32 [#allocation11], 4
      %s776 = int_to_ptr.vmem [resolvable:$true] %s775
      %s777 = sshll.u32 %s4, 4
      %s778 = int_to_ptr.hbm [resolvable:$true] %s777
      %780 = dma.vmem_to_hbm [thread:$0]  %s776, 512, %s778, [#allocation5]
    $region45: #{tpu_custom_call.1} parent=1 // pred_fallthru
      _
    // Predicated region
    $region46: #{tpu_custom_call.1} parent=1 // pred_check
      _
    $region47: #{tpu_custom_call.1} parent=1 // pred_check_branch
      %782 = sbr.rel (0) target = $region49
    $region48: #{tpu_custom_call.1} parent=1 // pred_region
      %784 = dma.done [#allocation5], 512
    $region49: #{tpu_custom_call.1} parent=1 // pred_fallthru
      _
    %785 = vsyncpa [#allocation4], 1
    %786 = vsyncpa [#allocation7], 1
    %787 = vsyncpa [#allocation10], 1
    %788 = vsyncpa [#allocation5], 1

</llo_original>
